<compile_context>
chip_gen: v6e
topology: v6e:2x2x1
jax: 0.10.0
libtpu: 0.0.40
codegen_flags: <defaults>
</compile_context>

<pallas_src>
import jax
import jax.numpy as jnp
from jax.experimental import pallas as pl
from jax.experimental.pallas import tpu as pltpu


def _patch_merge_kernel(x_ref, gb_ref, w_ref, o_ref):
    # x_ref:  (1, th, 2, Ww, 2C)  input block, layout (b, hh, dh, ww, dw*C + c)
    # gb_ref: (2, 4C)             row 0 = gamma, row 1 = beta (channel-permuted)
    # w_ref:  (4C, 2C)            reduction weight (in x out), rows permuted
    # o_ref:  (1, th*Ww, 2C)      merged-token output block
    xb = x_ref[...]
    _, th, _, ww, two_c = xb.shape
    n_tok = th * ww
    four_c = 2 * two_c

    # dh = 0 rows hold [x0 | x2] per merged token, dh = 1 rows hold [x1 | x3].
    top = xb[0, :, 0, :, :].reshape(n_tok, two_c)
    bot = xb[0, :, 1, :, :].reshape(n_tok, two_c)
    # Channel order [x0, x2, x1, x3]; params were permuted to match.
    x = jnp.concatenate([top, bot], axis=-1).astype(jnp.float32)  # (n_tok, 4C)

    # LayerNorm over 4C: single pass — sum(x) and sum(x*x) computed together,
    # var = E[x^2] - mean^2 (clamped), f32 math regardless of input dtype.
    inv_n = 1.0 / four_c
    s1 = jnp.sum(x, axis=-1, keepdims=True)
    s2 = jnp.sum(x * x, axis=-1, keepdims=True)
    mean = s1 * inv_n
    var = jnp.maximum(s2 * inv_n - mean * mean, 0.0)
    inv = jax.lax.rsqrt(var + 1e-5)

    gamma = gb_ref[0:1, :].astype(jnp.float32)
    beta = gb_ref[1:2, :].astype(jnp.float32)
    xn = (x - mean) * inv * gamma + beta

    # Matmul with native-dtype operands (bf16 weights stay bf16 on v6e/v7x),
    # f32 accumulation on the MXU.
    y = jnp.dot(xn.astype(w_ref.dtype), w_ref[...],
                preferred_element_type=jnp.float32)
    o_ref[0] = y.astype(o_ref.dtype)


def _pick_row_tile(B, Hh, Ww, C, itemsize, *,
                   max_tokens=2048, max_block_bytes=4 << 20):
    """Largest divisor of Hh whose strip (th*Ww tokens x 4C) fits the budget."""
    divisors = [d for d in range(1, Hh + 1) if Hh % d == 0]
    best = 1
    for th in divisors:
        tok = th * Ww
        if tok <= max_tokens and tok * 4 * C * itemsize <= max_block_bytes:
            best = th
    # Keep at least 2 grid steps so both v7x TensorCores get work.
    while B * (Hh // best) < 2:
        smaller = [d for d in divisors if d < best]
        if not smaller:
            break
        best = smaller[-1]
    return best


def patch_merging(x, input_resolution, gamma, beta, weight):
    """x: (B, L, C) with L == H*W. Returns (B, L//4, 2C)."""
    H, W = input_resolution
    B, L, C = x.shape
    assert L == H * W, "input feature has wrong size"
    assert H % 2 == 0 and W % 2 == 0, "resolution must be even"
    Hh, Ww = H // 2, W // 2
    four_c, two_c = 4 * C, 2 * C

    # Free reshape (pure dim split on a contiguous array): no gather in HBM.
    x5 = x.reshape(B, Hh, 2, Ww, 2 * C)

    # Permute channels of the params to match the fused gather order
    # [x0, x2, x1, x3] (LayerNorm stats are permutation-invariant).
    def perm(p):
        return jnp.concatenate(
            [p[0:C], p[2 * C:3 * C], p[C:2 * C], p[3 * C:4 * C]], axis=0)

    gb = jnp.stack([perm(gamma), perm(beta)], axis=0)   # (2, 4C)
    w_t = perm(weight.T)                                # (4C, 2C), rows permuted

    in_bytes = jnp.dtype(x.dtype).itemsize
    w_bytes = jnp.dtype(weight.dtype).itemsize
    th = _pick_row_tile(B, Hh, Ww, C, in_bytes)
    n_tok = th * Ww
    grid = (B, Hh // th)

    M = B * Hh * Ww
    cost = pl.CostEstimate(
        flops=int(2 * M * four_c * two_c + 8 * M * four_c),
        transcendentals=int(M),
        bytes_accessed=int(M * four_c * in_bytes + M * two_c * in_bytes
                           + four_c * two_c * w_bytes + 2 * four_c * 4),
    )

    # Explicit VMEM budget (headroom for (8,128) tile padding + double
    # buffering); capped well below the 64 MiB v7x part.
    blk_in = n_tok * four_c * in_bytes
    blk_out = n_tok * two_c * in_bytes
    w_sz = four_c * two_c * w_bytes + 2 * four_c * 4
    vmem_limit = int(min(max(3 * (2 * (blk_in + blk_out) + 2 * w_sz),
                             16 << 20), 48 << 20))

    # NOTE: for small C (2C < 128, e.g. this test config) the output tile is
    # not lane-dense and v5e takes masked partial stores; real Swin stages
    # (C >= 96) are lane-dense.
    out = pl.pallas_call(
        _patch_merge_kernel,
        out_shape=jax.ShapeDtypeStruct((B, Hh * Ww, two_c), x.dtype),
        grid_spec=pltpu.PrefetchScalarGridSpec(
            num_scalar_prefetch=0,
            grid=grid,
            in_specs=[
                pl.BlockSpec((1, th, 2, Ww, 2 * C),
                             lambda b, i: (b, i, 0, 0, 0)),
                pl.BlockSpec((2, four_c), lambda b, i: (0, 0)),
                pl.BlockSpec((four_c, two_c), lambda b, i: (0, 0)),
            ],
            out_specs=pl.BlockSpec((1, n_tok, two_c), lambda b, i: (b, i, 0)),
        ),
        compiler_params=pltpu.CompilerParams(
            dimension_semantics=("parallel", "parallel"),
            vmem_limit_bytes=vmem_limit,
        ),
        cost_estimate=cost,
    )(x5, gb, w_t)

    return out


def patch_merging_ref(x, input_resolution, gamma, beta, weight):
    """Pure-JAX reference mirroring the PyTorch PatchMerging.forward."""
    H, W = input_resolution
    B, L, C = x.shape
    xhw = x.reshape(B, H, W, C)
    x0 = xhw[:, 0::2, 0::2, :]
    x1 = xhw[:, 1::2, 0::2, :]
    x2 = xhw[:, 0::2, 1::2, :]
    x3 = xhw[:, 1::2, 1::2, :]
    xm = jnp.concatenate([x0, x1, x2, x3], axis=-1).reshape(B, -1, 4 * C)
    mean = jnp.mean(xm, axis=-1, keepdims=True)
    var = jnp.mean((xm - mean) ** 2, axis=-1, keepdims=True)
    xn = (xm - mean) * jax.lax.rsqrt(var + 1e-5) * gamma + beta
    return xn @ weight.T


if __name__ == "__main__":
    key = jax.random.PRNGKey(0)
    k_x, k_w = jax.random.split(key)

    B, H, W, C = 2, 16, 16, 32
    input_resolution = (H, W)

    x = jax.random.normal(k_x, (B, H * W, C), dtype=jnp.float32)

    # Deterministic parameter init (shapes from the module's __init__):
    #   reduction: Linear(4C -> 2C, bias=False)  -> weight (2C, 4C)
    #   norm: LayerNorm(4C)                      -> gamma/beta (4C,)
    weight = jax.random.normal(k_w, (2 * C, 4 * C), dtype=jnp.float32) * 0.02
    gamma = jnp.ones((4 * C,), dtype=jnp.float32)
    beta = jnp.zeros((4 * C,), dtype=jnp.float32)

    out = patch_merging(x, input_resolution, gamma, beta, weight)
    out = jax.block_until_ready(out)

    ref = patch_merging_ref(x, input_resolution, gamma, beta, weight)
    assert out.shape == (B, (H // 2) * (W // 2), 2 * C), out.shape
    assert jnp.allclose(out, ref, atol=2e-4, rtol=2e-4), "mismatch vs reference"

    print("KERNEL_OK")
</pallas_src>

<mosaic_0001>
module attributes {stable_mosaic.version = 11 : i64} {
  func.func @_patch_merge_kernel(%arg0: i32, %arg1: i32, %arg2: memref<1x8x2x8x64xf32, #tpu.memory_space<vmem>>, %arg3: memref<2x128xf32, #tpu.memory_space<vmem>>, %arg4: memref<128x64xf32, #tpu.memory_space<vmem>>, %arg5: memref<1x64x64xf32, #tpu.memory_space<vmem>>) attributes {dimension_semantics = [#tpu.dimension_semantics<parallel>, #tpu.dimension_semantics<parallel>], iteration_bounds = array<i64: 2, 1>, scalar_prefetch = 0 : i64, scratch_operands = 0 : i64, tpu.core_type = #tpu.core_type<tc>, window_params = [{transform_indices = @transform_0, window_bounds = array<i64: 1, 8, 2, 8, 64>}, {pipeline_mode = #tpu.pipeline_mode<synchronous>, transform_indices = @transform_1, window_bounds = array<i64: 2, 128>}, {pipeline_mode = #tpu.pipeline_mode<synchronous>, transform_indices = @transform_2, window_bounds = array<i64: 128, 64>}, {transform_indices = @transform_3, window_bounds = array<i64: 1, 64, 64>}]} {
    %c0 = arith.constant 0 : index
    %c0_0 = arith.constant 0 : index
    %c0_1 = arith.constant 0 : index
    %c0_2 = arith.constant 0 : index
    %c0_3 = arith.constant 0 : index
    %0 = vector.load %arg2[%c0, %c0_0, %c0_1, %c0_2, %c0_3] : memref<1x8x2x8x64xf32, #tpu.memory_space<vmem>>, vector<1x8x2x8x64xf32>
    %1 = vector.extract_strided_slice %0 {offsets = [0, 0, 0, 0, 0], sizes = [1, 8, 1, 8, 64], strides = [1, 1, 1, 1, 1]} : vector<1x8x2x8x64xf32> to vector<1x8x1x8x64xf32>
    %2 = vector.shape_cast %1 : vector<1x8x1x8x64xf32> to vector<8x8x64xf32>
    %3 = vector.shape_cast %2 : vector<8x8x64xf32> to vector<64x64xf32>
    %4 = vector.extract_strided_slice %0 {offsets = [0, 0, 1, 0, 0], sizes = [1, 8, 1, 8, 64], strides = [1, 1, 1, 1, 1]} : vector<1x8x2x8x64xf32> to vector<1x8x1x8x64xf32>
    %5 = vector.shape_cast %4 : vector<1x8x1x8x64xf32> to vector<8x8x64xf32>
    %6 = vector.shape_cast %5 : vector<8x8x64xf32> to vector<64x64xf32>
    %7 = tpu.concatenate %3, %6 in 1 : vector<64x64xf32>, vector<64x64xf32> -> vector<64x128xf32>
    %cst = arith.constant dense<0.000000e+00> : vector<64xf32>
    %8 = vector.multi_reduction <add>, %7, %cst [1] : vector<64x128xf32> to vector<64xf32>
    %9 = vector.shape_cast %8 : vector<64xf32> to vector<64x1xf32>
    %10 = arith.mulf %7, %7 : vector<64x128xf32>
    %cst_4 = arith.constant dense<0.000000e+00> : vector<64xf32>
    %11 = vector.multi_reduction <add>, %10, %cst_4 [1] : vector<64x128xf32> to vector<64xf32>
    %12 = vector.shape_cast %11 : vector<64xf32> to vector<64x1xf32>
    %cst_5 = arith.constant 7.812500e-03 : f32
    %13 = vector.broadcast %cst_5 : f32 to vector<64x1xf32>
    %14 = arith.mulf %9, %13 : vector<64x1xf32>
    %cst_6 = arith.constant 7.812500e-03 : f32
    %15 = vector.broadcast %cst_6 : f32 to vector<64x1xf32>
    %16 = arith.mulf %12, %15 : vector<64x1xf32>
    %17 = arith.mulf %14, %14 : vector<64x1xf32>
    %18 = arith.subf %16, %17 : vector<64x1xf32>
    %cst_7 = arith.constant 0.000000e+00 : f32
    %19 = vector.broadcast %cst_7 : f32 to vector<64x1xf32>
    %20 = arith.maximumf %18, %19 : vector<64x1xf32>
    %cst_8 = arith.constant 9.99999974E-6 : f32
    %21 = vector.broadcast %cst_8 : f32 to vector<64x1xf32>
    %22 = arith.addf %20, %21 : vector<64x1xf32>
    %23 = math.rsqrt %22 : vector<64x1xf32>
    %c0_9 = arith.constant 0 : index
    %c0_10 = arith.constant 0 : index
    %24 = vector.load %arg3[%c0_9, %c0_10] : memref<2x128xf32, #tpu.memory_space<vmem>>, vector<1x128xf32>
    %c1 = arith.constant 1 : index
    %c0_11 = arith.constant 0 : index
    %25 = vector.load %arg3[%c1, %c0_11] : memref<2x128xf32, #tpu.memory_space<vmem>>, vector<1x128xf32>
    %26 = vector.broadcast %14 : vector<64x1xf32> to vector<64x128xf32>
    %27 = arith.subf %7, %26 : vector<64x128xf32>
    %28 = vector.broadcast %23 : vector<64x1xf32> to vector<64x128xf32>
    %29 = arith.mulf %27, %28 : vector<64x128xf32>
    %30 = vector.broadcast %24 : vector<1x128xf32> to vector<64x128xf32>
    %31 = arith.mulf %29, %30 : vector<64x128xf32>
    %32 = vector.broadcast %25 : vector<1x128xf32> to vector<64x128xf32>
    %33 = arith.addf %31, %32 : vector<64x128xf32>
    %c0_12 = arith.constant 0 : index
    %c0_13 = arith.constant 0 : index
    %34 = vector.load %arg4[%c0_12, %c0_13] : memref<128x64xf32, #tpu.memory_space<vmem>>, vector<128x64xf32>
    %cst_14 = arith.constant dense<0.000000e+00> : vector<64x64xf32>
    %35 = tpu.matmul %33, %34, %cst_14 {dimension_numbers = #tpu.dot_dimension_numbers<[1], [0], [0], [1], [0, 0, 1, 1], [], []>} : vector<64x128xf32>, vector<128x64xf32>, vector<64x64xf32> -> vector<64x64xf32>
    %c0_15 = arith.constant 0 : index
    %c0_16 = arith.constant 0 : index
    %c0_17 = arith.constant 0 : index
    %36 = vector.load %arg5[%c0_15, %c0_16, %c0_17] : memref<1x64x64xf32, #tpu.memory_space<vmem>>, vector<1x64x64xf32>
    %37 = vector.shape_cast %36 : vector<1x64x64xf32> to vector<64x64xf32>
    %38 = vector.shape_cast %35 : vector<64x64xf32> to vector<1x64x64xf32>
    tpu.vector_store %arg5[%c0_15, %c0_16, %c0_17], %38 {strides = array<i32>} : memref<1x64x64xf32, #tpu.memory_space<vmem>>, vector<1x64x64xf32>,
    return
  }
  func.func @transform_0(%arg0: i32, %arg1: i32) -> (i32, i32, i32, i32, i32) {
    %c0_i32 = arith.constant 0 : i32
    %c0_i32_0 = arith.constant 0 : i32
    %c0_i32_1 = arith.constant 0 : i32
    %c0_i32_2 = arith.constant 0 : i32
    return %arg0, %arg1, %c0_i32, %c0_i32_0, %c0_i32_1 : i32, i32, i32, i32, i32
  }
  func.func @transform_1(%arg0: i32, %arg1: i32) -> (i32, i32) {
    %c0_i32 = arith.constant 0 : i32
    %c0_i32_0 = arith.constant 0 : i32
    %c0_i32_1 = arith.constant 0 : i32
    return %c0_i32, %c0_i32_0 : i32, i32
  }
  func.func @transform_2(%arg0: i32, %arg1: i32) -> (i32, i32) {
    %c0_i32 = arith.constant 0 : i32
    %c0_i32_0 = arith.constant 0 : i32
    %c0_i32_1 = arith.constant 0 : i32
    return %c0_i32, %c0_i32_0 : i32, i32
  }
  func.func @transform_3(%arg0: i32, %arg1: i32) -> (i32, i32, i32) {
    %c0_i32 = arith.constant 0 : i32
    %c0_i32_0 = arith.constant 0 : i32
    return %arg0, %arg1, %c0_i32 : i32, i32, i32
  }
}

</mosaic_0001>

<llo_original>
// kernel: tpu_custom_call.1
$region0: #{tpu_custom_call.1}
  #allocation0 [shape = 'u32[]', space=smem, size = 0x4, offset = 0x4, fixed_abs, tag = 'smem constant byte address 0x4 - core index']
  #allocation1 [shape = 'u32[144,128]{1,0:T(1,128)}', space=vmem, size = 0x12000, scoped, tag = 'internal scratch']
  %s0 = inlined_call_operand.hbm [shape: f32[2,8,2,8,64], index: 0, kind: input, shape index: {}]
  %s1 = inlined_call_operand.vmem [shape: f32[2,128], index: 1, kind: input, shape index: {}]
  %s2 = inlined_call_operand.vmem [shape: f32[128,64], index: 2, kind: input, shape index: {}]
  %s3 = inlined_call_operand.hbm [shape: f32[2,64,64], index: 3, kind: output, shape index: {}]
  %s4 = sld [smem:[#allocation0]]
  $region49: #{tpu_custom_call.1} parent=0
    _
  %s6 = ssub.s32 1, %s4
  %s7 = scalar_select 0, %s6, %s4
  $region1: #{tpu_custom_call.1} parent=0
    #allocation2 [shape = 'u8[131072]{0}', space=vmem, size = 0x20000, scoped, tag = 'input window, operand 0']
    #allocation3 [shape = 's32[2]{0}', space=sflag, size = 0x8, scoped, tag = 'scoped memory for tpu_custom_call.1']
    #allocation4 [shape = 's32[2]{0}', space=sflag, size = 0x8, scoped, tag = 'scoped memory for tpu_custom_call.1']
    #allocation5 [shape = 'u8[65536]{0}', space=vmem, size = 0x10000, scoped, tag = 'output window, operand 0']
    %8 = vsyncpa [#allocation3], 0
    %s9 = scalar_lea.sflag [#allocation3], 1
    %10 = vsyncpa %s9, 0
    %11 = vsyncpa [#allocation4], 0
    %s12 = scalar_lea.sflag [#allocation4], 1
    %13 = vsyncpa %s12, 0
    loop: start=0, step=1, limit=4
    $region2: #{tpu_custom_call.1} parent=1 // loop_pre_header
      _
    $region3: #{tpu_custom_call.1} parent=1 // loop_header
      %s15 = sphi 0, %s19
      %p16 = scmp.ge.s32.totalorder %s15, 4
      %s22 = sphi 0, %s34
      %s23 = sphi 0, %s30
      %s24 = sphi 0, %s22
      %s25 = sphi 0, %s23
      %s26 = sphi 0, %s24
      %s27 = sphi 0, %s25
      %s39 = sphi 0, %s41
      %s42 = sphi 0, %s39
      %s43 = sphi 0, %s42
      %s59 = sphi 0, %s43
      %s63 = sphi 0, %s63
      %s65 = sphi 0, %s63
      %s66 = sphi 0, %s65
      %s80 = sphi 0, %s66
      %s84 = sphi 0, %s84
      %s86 = sphi 0, %s84
      %s87 = sphi 0, %s86
      %s101 = sphi 0, %s87
      %s109 = sphi 0, %s111
      %s112 = sphi 0, %s109
      %s113 = sphi 0, %s112
      %s129 = sphi 0, %s113
    $region4: #{tpu_custom_call.1} parent=1 // loop_header_branch
      %18 = sbr.rel (%p16) target = $region8
    $region5: #{tpu_custom_call.1} parent=1 // loop_body
      %s20 = ssub.s32 %s15, 1
      %s21 = ssub.s32 %s15, 2
      %s28 = sadd.s32 1, %s23
      %p29 = scmp.ge.s32.totalorder %s28, 1
      %s30 = scalar_select %p29, 0, %s28
      %s31 = sadd.s32 1, %s22
      %s32 = scalar_select %p29, %s31, %s22
      %p33 = scmp.ge.s32.totalorder %s32, 2
      %s34 = scalar_select %p33, 0, %s32
      %s35 = ssub.s32 %s22, %s34
      %s36 = ssub.s32 %s23, %s30
      %s37 = sor.u32 %s35, %s36
      %p38 = scmp.eq.s32.totalorder %s37, 0
      %s40 = sadd.s32 %s39, 1
      %s41 = scalar_select %p38, %s39, %s40
      %p44 = pneg %p38
      %p45 = scmp.eq.s32.totalorder %s15, 1
      %p46 = por %p44, %p45
      %p47 = scmp.ne.s32.totalorder %s39, %s42
      %p48 = scmp.eq.s32.totalorder %s15, 0
      %p49 = por %p47, %p48
      %p50 = scmp.ne.s32.totalorder %s39, %s42
      %p51 = scmp.eq.s32.totalorder %s20, 1
      %p52 = por %p50, %p51
      %p53 = scmp.ne.s32.totalorder %s42, %s43
      %p54 = scmp.eq.s32.totalorder %s20, 0
      %p55 = por %p53, %p54
      %p56 = scmp.ne.s32.totalorder %s42, %s43
      %p57 = scmp.eq.s32.totalorder %s21, 1
      %p58 = por %p56, %p57
      %p60 = scmp.ne.s32.totalorder %s43, %s59
      %p61 = scmp.eq.s32.totalorder %s21, 0
      %p62 = por %p60, %p61
      %s64 = sadd.s32 %s63, 1
      %p67 = scmp.eq.s32.totalorder %s15, 1
      %p68 = scmp.ne.s32.totalorder %s63, %s65
      %p69 = scmp.eq.s32.totalorder %s15, 0
      %p70 = por %p68, %p69
      %p71 = scmp.ne.s32.totalorder %s63, %s65
      %p72 = scmp.eq.s32.totalorder %s20, 1
      %p73 = por %p71, %p72
      %p74 = scmp.ne.s32.totalorder %s65, %s66
      %p75 = scmp.eq.s32.totalorder %s20, 0
      %p76 = por %p74, %p75
      %p77 = scmp.ne.s32.totalorder %s65, %s66
      %p78 = scmp.eq.s32.totalorder %s21, 1
      %p79 = por %p77, %p78
      %p81 = scmp.ne.s32.totalorder %s66, %s80
      %p82 = scmp.eq.s32.totalorder %s21, 0
      %p83 = por %p81, %p82
      %s85 = sadd.s32 %s84, 1
      %p88 = scmp.eq.s32.totalorder %s15, 1
      %p89 = scmp.ne.s32.totalorder %s84, %s86
      %p90 = scmp.eq.s32.totalorder %s15, 0
      %p91 = por %p89, %p90
      %p92 = scmp.ne.s32.totalorder %s84, %s86
      %p93 = scmp.eq.s32.totalorder %s20, 1
      %p94 = por %p92, %p93
      %p95 = scmp.ne.s32.totalorder %s86, %s87
      %p96 = scmp.eq.s32.totalorder %s20, 0
      %p97 = por %p95, %p96
      %p98 = scmp.ne.s32.totalorder %s86, %s87
      %p99 = scmp.eq.s32.totalorder %s21, 1
      %p100 = por %p98, %p99
      %p102 = scmp.ne.s32.totalorder %s87, %s101
      %p103 = scmp.eq.s32.totalorder %s21, 0
      %p104 = por %p102, %p103
      %s105 = ssub.s32 %s22, %s34
      %s106 = ssub.s32 %s23, %s30
      %s107 = sor.u32 %s105, %s106
      %p108 = scmp.eq.s32.totalorder %s107, 0
      %s110 = sadd.s32 %s109, 1
      %s111 = scalar_select %p108, %s109, %s110
      %p114 = pneg %p108
      %p115 = scmp.eq.s32.totalorder %s15, 1
      %p116 = por %p114, %p115
      %p117 = scmp.ne.s32.totalorder %s109, %s112
      %p118 = scmp.eq.s32.totalorder %s15, 0
      %p119 = por %p117, %p118
      %p120 = scmp.ne.s32.totalorder %s109, %s112
      %p121 = scmp.eq.s32.totalorder %s20, 1
      %p122 = por %p120, %p121
      %p123 = scmp.ne.s32.totalorder %s112, %s113
      %p124 = scmp.eq.s32.totalorder %s20, 0
      %p125 = por %p123, %p124
      %p126 = scmp.ne.s32.totalorder %s112, %s113
      %p127 = scmp.eq.s32.totalorder %s21, 1
      %p128 = por %p126, %p127
      %p130 = scmp.ne.s32.totalorder %s113, %s129
      %p131 = scmp.eq.s32.totalorder %s21, 0
      %p132 = por %p130, %p131
      %p133 = scmp.le.s32.totalorder 1, %s15
      %p134 = scmp.lt.s32.totalorder %s15, 3
      %p135 = pnand %p133, %p134
      %p136 = pneg %p135
      // Predicated region
      $region9: #{tpu_custom_call.1} parent=5 // pred_check
        _
      $region10: #{tpu_custom_call.1} parent=5 // pred_check_branch
        %138 = sbr.rel (%p135) target = $region12
      $region11: #{tpu_custom_call.1} parent=5 // pred_region
        %s139 = ssub.s32 %s15, 1
        // Predicated region
        $region13: #{tpu_custom_call.1} parent=11 // pred_check
          %p140 = pneg %p76
        $region14: #{tpu_custom_call.1} parent=11 // pred_check_branch
          %142 = sbr.rel (%p140) target = $region16
        $region15: #{tpu_custom_call.1} parent=11 // pred_region
          _
        $region16: #{tpu_custom_call.1} parent=11 // pred_fallthru
          _
        // Predicated region
        $region17: #{tpu_custom_call.1} parent=11 // pred_check
          %p143 = pneg %p97
        $region18: #{tpu_custom_call.1} parent=11 // pred_check_branch
          %145 = sbr.rel (%p143) target = $region20
        $region19: #{tpu_custom_call.1} parent=11 // pred_region
          _
        $region20: #{tpu_custom_call.1} parent=11 // pred_fallthru
          _
      $region12: #{tpu_custom_call.1} parent=5 // pred_fallthru
        _
      %p146 = scmp.lt.s32.totalorder %s15, 2
      // Predicated region
      $region21: #{tpu_custom_call.1} parent=5 // pred_check
        %p147 = pneg %p146
      $region22: #{tpu_custom_call.1} parent=5 // pred_check_branch
        %149 = sbr.rel (%p147) target = $region24
      $region23: #{tpu_custom_call.1} parent=5 // pred_region
        // Predicated region
        $region25: #{tpu_custom_call.1} parent=23 // pred_check
          %p150 = pneg %p49
        $region26: #{tpu_custom_call.1} parent=23 // pred_check_branch
          %152 = sbr.rel (%p150) target = $region28
        $region27: #{tpu_custom_call.1} parent=23 // pred_region
          %s153 = sand.u32 %s39, 1
          %s154 = scalar_lea.sflag [#allocation3], %s153
          %s155 = sand.u32 %s39, 1
          %s156 = smul.addr %s155, 128
          %s157 = scalar_lea.vmem [#allocation2], %s156
          %s158 = smul.u32 8, %s23
          %s160 = ssub.s32 2048, 2048
          %161 = vsyncadd %s154, %s160
          %s162 = smul.addr %s158, 2
          %s163 = smul.addr %s22, 16
          %s164 = sadd.s32 %s162, %s163
          %s165 = smul.addr %s164, 128
          %s166 = scalar_lea.hbm %s0, %s165
          %s167 = sshll.u32 %s157, 4
          %s168 = int_to_ptr.vmem [resolvable:$true] %s167
          %173 = dma.hbm_to_vmem [thread:$0]  %s166, 2048, %s168, %s154, 128, 128, 8
        $region28: #{tpu_custom_call.1} parent=23 // pred_fallthru
          _
      $region24: #{tpu_custom_call.1} parent=5 // pred_fallthru
        _
      %p174 = scmp.le.s32.totalorder 1, %s15
      %p175 = scmp.lt.s32.totalorder %s15, 3
      %p176 = pnand %p174, %p175
      %p177 = pneg %p176
      // Predicated region
      $region29: #{tpu_custom_call.1} parent=5 // pred_check
        _
      $region30: #{tpu_custom_call.1} parent=5 // pred_check_branch
        %179 = sbr.rel (%p176) target = $region32
      $region31: #{tpu_custom_call.1} parent=5 // pred_region
        %s180 = ssub.s32 %s15, 1
        %s181 = sand.u32 %s42, 1
        %s182 = scalar_lea.sflag [#allocation3], %s181
        %s183 = sand.u32 %s42, 1
        %s184 = smul.addr %s183, 128
        %s185 = scalar_lea.vmem [#allocation2], %s184
        // Predicated region
        $region33: #{tpu_custom_call.1} parent=31 // pred_check
          %p186 = pneg %p55
        $region34: #{tpu_custom_call.1} parent=31 // pred_check_branch
          %188 = sbr.rel (%p186) target = $region36
        $region35: #{tpu_custom_call.1} parent=31 // pred_region
          %189 = dma.done %s182, 2048
        $region36: #{tpu_custom_call.1} parent=31 // pred_fallthru
          _
        %s190 = sand.u32 %s42, 1
        %s191 = scalar_lea.sflag [#allocation3], %s190
        %s192 = sand.u32 %s42, 1
        %s193 = smul.addr %s192, 128
        %s194 = scalar_lea.vmem [#allocation2], %s193
        %p195 = pneg %p55
        %p196 = pneg %p52
        %p197 = pneg %p76
        %p198 = pneg %p73
        %p199 = pneg %p97
        %p200 = pneg %p94
        %p201 = pneg %p125
        %p202 = pneg %p122
        %s203 = sand.u32 %s112, 1
        %s204 = scalar_lea.sflag [#allocation4], %s203
        %s205 = sand.u32 %s112, 1
        %s206 = smul.addr %s205, 64
        %s207 = scalar_lea.vmem [#allocation5], %s206
        %s208 = smul.u32 8, %s25
        %s209 = smul.u32 8, %s25
        %v210 = vld [vmem:[%s185] sm:$0xff]
        %v211 = vld [vmem:[%s185 + $0x8] sm:$0xff]
        %v212 = vld [vmem:[%s185 + $0x10] sm:$0xff]
        %v213 = vld [vmem:[%s185 + $0x18] sm:$0xff]
        %v214 = vld [vmem:[%s185 + $0x20] sm:$0xff]
        %v215 = vld [vmem:[%s185 + $0x28] sm:$0xff]
        %v216 = vld [vmem:[%s185 + $0x30] sm:$0xff]
        %v217 = vld [vmem:[%s185 + $0x38] sm:$0xff]
        %v218 = vld [vmem:[%s185 + $0x40] sm:$0xff]
        %v219 = vld [vmem:[%s185 + $0x48] sm:$0xff]
        %v220 = vld [vmem:[%s185 + $0x50] sm:$0xff]
        %v221 = vld [vmem:[%s185 + $0x58] sm:$0xff]
        %v222 = vld [vmem:[%s185 + $0x60] sm:$0xff]
        %v223 = vld [vmem:[%s185 + $0x68] sm:$0xff]
        %v224 = vld [vmem:[%s185 + $0x70] sm:$0xff]
        %v225 = vld [vmem:[%s185 + $0x78] sm:$0xff]
        %234 = vrot.lane.b32.xlu0 %v211, 64
        %v235 = vpop.permute.xlu0 %234
        %236 = vrot.lane.b32.xlu0 %v213, 64
        %v237 = vpop.permute.xlu0 %236
        %238 = vrot.lane.b32.xlu0 %v215, 64
        %v239 = vpop.permute.xlu0 %238
        %240 = vrot.lane.b32.xlu0 %v217, 64
        %v241 = vpop.permute.xlu0 %240
        %242 = vrot.lane.b32.xlu0 %v219, 64
        %v243 = vpop.permute.xlu0 %242
        %244 = vrot.lane.b32.xlu0 %v221, 64
        %v245 = vpop.permute.xlu0 %244
        %246 = vrot.lane.b32.xlu0 %v223, 64
        %v247 = vpop.permute.xlu0 %246
        %248 = vrot.lane.b32.xlu0 %v225, 64
        %v249 = vpop.permute.xlu0 %248
        %vm258 = vcmask 523264
        %v259 = vsel %vm258, %v210, %v235
        %v260 = vsel %vm258, %v212, %v237
        %v261 = vsel %vm258, %v214, %v239
        %v262 = vsel %vm258, %v216, %v241
        %v263 = vsel %vm258, %v218, %v243
        %v264 = vsel %vm258, %v220, %v245
        %v265 = vsel %vm258, %v222, %v247
        %v266 = vsel %vm258, %v224, %v249
        %267 = vadd.xlane.f32.xlu0 %v259
        %v268 = vpop.xlane.xlu0 %267
        %269 = vadd.xlane.f32.xlu0 %v260
        %v270 = vpop.xlane.xlu0 %269
        %271 = vadd.xlane.f32.xlu0 %v261
        %v272 = vpop.xlane.xlu0 %271
        %273 = vadd.xlane.f32.xlu0 %v262
        %v274 = vpop.xlane.xlu0 %273
        %275 = vadd.xlane.f32.xlu0 %v263
        %v276 = vpop.xlane.xlu0 %275
        %277 = vadd.xlane.f32.xlu0 %v264
        %v278 = vpop.xlane.xlu0 %277
        %279 = vadd.xlane.f32.xlu0 %v265
        %v280 = vpop.xlane.xlu0 %279
        %281 = vadd.xlane.f32.xlu0 %v266
        %v282 = vpop.xlane.xlu0 %281
        %v283 = vmul.f32 %v259, %v259
        %v284 = vmul.f32 %v260, %v260
        %v285 = vmul.f32 %v261, %v261
        %v286 = vmul.f32 %v262, %v262
        %v287 = vmul.f32 %v263, %v263
        %v288 = vmul.f32 %v264, %v264
        %v289 = vmul.f32 %v265, %v265
        %v290 = vmul.f32 %v266, %v266
        %291 = vadd.xlane.f32.xlu0 %v283
        %v292 = vpop.xlane.xlu0 %291
        %293 = vadd.xlane.f32.xlu0 %v284
        %v294 = vpop.xlane.xlu0 %293
        %295 = vadd.xlane.f32.xlu0 %v285
        %v296 = vpop.xlane.xlu0 %295
        %297 = vadd.xlane.f32.xlu0 %v286
        %v298 = vpop.xlane.xlu0 %297
        %299 = vadd.xlane.f32.xlu0 %v287
        %v300 = vpop.xlane.xlu0 %299
        %301 = vadd.xlane.f32.xlu0 %v288
        %v302 = vpop.xlane.xlu0 %301
        %303 = vadd.xlane.f32.xlu0 %v289
        %v304 = vpop.xlane.xlu0 %303
        %305 = vadd.xlane.f32.xlu0 %v290
        %v306 = vpop.xlane.xlu0 %305
        %v307 = vmul.f32 %v268, 0.0078125
        %v308 = vmul.f32 %v270, 0.0078125
        %v309 = vmul.f32 %v272, 0.0078125
        %v310 = vmul.f32 %v274, 0.0078125
        %v311 = vmul.f32 %v276, 0.0078125
        %v312 = vmul.f32 %v278, 0.0078125
        %v313 = vmul.f32 %v280, 0.0078125
        %v314 = vmul.f32 %v282, 0.0078125
        %v315 = vmul.f32 %v292, 0.0078125
        %v316 = vmul.f32 %v294, 0.0078125
        %v317 = vmul.f32 %v296, 0.0078125
        %v318 = vmul.f32 %v298, 0.0078125
        %v319 = vmul.f32 %v300, 0.0078125
        %v320 = vmul.f32 %v302, 0.0078125
        %v321 = vmul.f32 %v304, 0.0078125
        %v322 = vmul.f32 %v306, 0.0078125
        %v323 = vmul.f32 %v307, %v307
        %v324 = vmul.f32 %v308, %v308
        %v325 = vmul.f32 %v309, %v309
        %v326 = vmul.f32 %v310, %v310
        %v327 = vmul.f32 %v311, %v311
        %v328 = vmul.f32 %v312, %v312
        %v329 = vmul.f32 %v313, %v313
        %v330 = vmul.f32 %v314, %v314
        %v331 = vsub.f32 %v315, %v323
        %v332 = vsub.f32 %v316, %v324
        %v333 = vsub.f32 %v317, %v325
        %v334 = vsub.f32 %v318, %v326
        %v335 = vsub.f32 %v319, %v327
        %v336 = vsub.f32 %v320, %v328
        %v337 = vsub.f32 %v321, %v329
        %v338 = vsub.f32 %v322, %v330
        %v339 = vmax.f32 %v331, 0.0
        %v340 = vmax.f32 %v332, 0.0
        %v341 = vmax.f32 %v333, 0.0
        %v342 = vmax.f32 %v334, 0.0
        %v343 = vmax.f32 %v335, 0.0
        %v344 = vmax.f32 %v336, 0.0
        %v345 = vmax.f32 %v337, 0.0
        %v346 = vmax.f32 %v338, 0.0
        %v347 = vadd.f32 %v339, 1e-05
        %v348 = vadd.f32 %v340, 1e-05
        %v349 = vadd.f32 %v341, 1e-05
        %v350 = vadd.f32 %v342, 1e-05
        %v351 = vadd.f32 %v343, 1e-05
        %v352 = vadd.f32 %v344, 1e-05
        %v353 = vadd.f32 %v345, 1e-05
        %v354 = vadd.f32 %v346, 1e-05
        %v355 = vrsqrt.pop %v347
        %v356 = vrsqrt.pop %v348
        %v357 = vrsqrt.pop %v349
        %v358 = vrsqrt.pop %v350
        %v359 = vrsqrt.pop %v351
        %v360 = vrsqrt.pop %v352
        %v361 = vrsqrt.pop %v353
        %v362 = vrsqrt.pop %v354
        %v363 = vld [vmem:[%s1] sm:$0x1]
        %v364 = vld [vmem:[%s1 + $0x1] sm:$0x1]
        %v365 = vsub.f32 %v259, %v307
        %v366 = vsub.f32 %v260, %v308
        %v367 = vsub.f32 %v261, %v309
        %v368 = vsub.f32 %v262, %v310
        %v369 = vsub.f32 %v263, %v311
        %v370 = vsub.f32 %v264, %v312
        %v371 = vsub.f32 %v265, %v313
        %v372 = vsub.f32 %v266, %v314
        %v373 = vmul.f32 %v365, %v355
        %v374 = vmul.f32 %v366, %v356
        %v375 = vmul.f32 %v367, %v357
        %v376 = vmul.f32 %v368, %v358
        %v377 = vmul.f32 %v369, %v359
        %v378 = vmul.f32 %v370, %v360
        %v379 = vmul.f32 %v371, %v361
        %v380 = vmul.f32 %v372, %v362
        %v381 = vlaneseq
        %v382 = vshrl.u32 %v381, 7
        %v383 = vsub.s32 0, %v382
        %v384 = vrot.slane %v363, %v383
        %v385 = vmul.f32 %v373, %v384
        %v386 = vmul.f32 %v374, %v384
        %v387 = vmul.f32 %v375, %v384
        %v388 = vmul.f32 %v376, %v384
        %v389 = vmul.f32 %v377, %v384
        %v390 = vmul.f32 %v378, %v384
        %v391 = vmul.f32 %v379, %v384
        %v392 = vmul.f32 %v380, %v384
        %v393 = vlaneseq
        %v394 = vshrl.u32 %v393, 7
        %v395 = vsub.s32 0, %v394
        %v396 = vrot.slane %v364, %v395
        %v397 = vadd.f32 %v385, %v396
        %v398 = vadd.f32 %v386, %v396
        %v399 = vadd.f32 %v387, %v396
        %v400 = vadd.f32 %v388, %v396
        %v401 = vadd.f32 %v389, %v396
        %v402 = vadd.f32 %v390, %v396
        %v403 = vadd.f32 %v391, %v396
        %v404 = vadd.f32 %v392, %v396
        %v405 = vld [vmem:[%s2] sm:$0xff]
        %v406 = vld [vmem:[%s2 + $0x8] sm:$0xff]
        %v407 = vld [vmem:[%s2 + $0x10] sm:$0xff]
        %v408 = vld [vmem:[%s2 + $0x18] sm:$0xff]
        %v409 = vld [vmem:[%s2 + $0x20] sm:$0xff]
        %v410 = vld [vmem:[%s2 + $0x28] sm:$0xff]
        %v411 = vld [vmem:[%s2 + $0x30] sm:$0xff]
        %v412 = vld [vmem:[%s2 + $0x38] sm:$0xff]
        %v413 = vld [vmem:[%s2 + $0x40] sm:$0xff]
        %v414 = vld [vmem:[%s2 + $0x48] sm:$0xff]
        %v415 = vld [vmem:[%s2 + $0x50] sm:$0xff]
        %v416 = vld [vmem:[%s2 + $0x58] sm:$0xff]
        %v417 = vld [vmem:[%s2 + $0x60] sm:$0xff]
        %v418 = vld [vmem:[%s2 + $0x68] sm:$0xff]
        %v419 = vld [vmem:[%s2 + $0x70] sm:$0xff]
        %v420 = vld [vmem:[%s2 + $0x78] sm:$0xff]
        %421 = vmatprep.subr.mxu0 0.0
        %422 = vmatpush1.msra.mxu0 %v420
        %423 = vmatprep.subr.mxu0 0.0
        %424 = vmatpush1.msra.mxu0 %v419
        %425 = vmatprep.subr.mxu0 0.0
        %426 = vmatpush1.msra.mxu0 %v418
        %427 = vmatprep.subr.mxu0 0.0
        %428 = vmatpush1.msra.mxu0 %v417
        %429 = vmatprep.subr.mxu0 0.0
        %430 = vmatpush1.msra.mxu0 %v416
        %431 = vmatprep.subr.mxu0 0.0
        %432 = vmatpush1.msra.mxu0 %v415
        %433 = vmatprep.subr.mxu0 0.0
        %434 = vmatpush1.msra.mxu0 %v414
        %435 = vmatprep.subr.mxu0 0.0
        %436 = vmatpush1.msra.mxu0 %v413
        %437 = vmatprep.subr.mxu0 0.0
        %438 = vmatpush1.msra.mxu0 %v412
        %439 = vmatprep.subr.mxu0 0.0
        %440 = vmatpush1.msra.mxu0 %v411
        %441 = vmatprep.subr.mxu0 0.0
        %442 = vmatpush1.msra.mxu0 %v410
        %443 = vmatprep.subr.mxu0 0.0
        %444 = vmatpush1.msra.mxu0 %v409
        %445 = vmatprep.subr.mxu0 0.0
        %446 = vmatpush1.msra.mxu0 %v408
        %447 = vmatprep.subr.mxu0 0.0
        %448 = vmatpush1.msra.mxu0 %v407
        %449 = vmatprep.subr.mxu0 0.0
        %450 = vmatpush1.msra.mxu0 %v406
        %451 = vmatprep.subr.mxu0 0.0
        %452 = vmatpush1.msra.mxu0 %v405
        %453 = vmatprep.subr.mxu0 0.0
        %454 = vmatpush2.msra.mxu0 0.0
        %455 = vmatprep.subr.mxu0 0.0
        %456 = vmatpush2.msra.mxu0 0.0
        %457 = vmatprep.subr.mxu0 0.0
        %458 = vmatpush2.msra.mxu0 0.0
        %459 = vmatprep.subr.mxu0 0.0
        %460 = vmatpush2.msra.mxu0 0.0
        %461 = vmatprep.subr.mxu0 0.0
        %462 = vmatpush2.msra.mxu0 0.0
        %463 = vmatprep.subr.mxu0 0.0
        %464 = vmatpush2.msra.mxu0 0.0
        %465 = vmatprep.subr.mxu0 0.0
        %466 = vmatpush2.msra.mxu0 0.0
        %467 = vmatprep.subr.mxu0 0.0
        %468 = vmatpush2.msra.mxu0 0.0
        %469 = vmatprep.subr.mxu0 0.0
        %470 = vmatpush2.msra.mxu0 0.0
        %471 = vmatprep.subr.mxu0 0.0
        %472 = vmatpush2.msra.mxu0 0.0
        %473 = vmatprep.subr.mxu0 0.0
        %474 = vmatpush2.msra.mxu0 0.0
        %475 = vmatprep.subr.mxu0 0.0
        %476 = vmatpush2.msra.mxu0 0.0
        %477 = vmatprep.subr.mxu0 0.0
        %478 = vmatpush2.msra.mxu0 0.0
        %479 = vmatprep.subr.mxu0 0.0
        %480 = vmatpush2.msra.mxu0 0.0
        %481 = vmatprep.subr.mxu0 0.0
        %482 = vmatpush2.msra.mxu0 0.0
        %483 = vmatprep.subr.mxu0 0.0
        %484 = vmatpush2.msra.mxu0 0.0
        %485 = vmatprep.mubr.f32.mxu0 0.0
        %486 = vmatmul.mubr.f32.gmra.mxu0 %v397
        %v487 = vpop.f32.mrf.mxu0
        %v488 = vadd.f32 0.0, %v487
        %v489 = vpop.f32.mrf.mxu0
        %490 = vmatprep.mubr.f32.mxu0 0.0
        %491 = vmatmul.mubr.f32.gmra.mxu0 %v398
        %v492 = vpop.f32.mrf.mxu0
        %v493 = vadd.f32 0.0, %v492
        %v494 = vpop.f32.mrf.mxu0
        %495 = vmatprep.mubr.f32.mxu0 0.0
        %496 = vmatmul.mubr.f32.gmra.mxu0 %v399
        %v497 = vpop.f32.mrf.mxu0
        %v498 = vadd.f32 0.0, %v497
        %v499 = vpop.f32.mrf.mxu0
        %500 = vmatprep.mubr.f32.mxu0 0.0
        %501 = vmatmul.mubr.f32.gmra.mxu0 %v400
        %v502 = vpop.f32.mrf.mxu0
        %v503 = vadd.f32 0.0, %v502
        %v504 = vpop.f32.mrf.mxu0
        %505 = vmatprep.mubr.f32.mxu0 0.0
        %506 = vmatmul.mubr.f32.gmra.mxu0 %v401
        %v507 = vpop.f32.mrf.mxu0
        %v508 = vadd.f32 0.0, %v507
        %v509 = vpop.f32.mrf.mxu0
        %510 = vmatprep.mubr.f32.mxu0 0.0
        %511 = vmatmul.mubr.f32.gmra.mxu0 %v402
        %v512 = vpop.f32.mrf.mxu0
        %v513 = vadd.f32 0.0, %v512
        %v514 = vpop.f32.mrf.mxu0
        %515 = vmatprep.mubr.f32.mxu0 0.0
        %516 = vmatmul.mubr.f32.gmra.mxu0 %v403
        %v517 = vpop.f32.mrf.mxu0
        %v518 = vadd.f32 0.0, %v517
        %v519 = vpop.f32.mrf.mxu0
        %520 = vmatprep.mubr.f32.mxu0 0.0
        %521 = vmatmul.mubr.f32.gmra.mxu0 %v404
        %v522 = vpop.f32.mrf.mxu0
        %v523 = vadd.f32 0.0, %v522
        %v524 = vpop.f32.mrf.mxu0
        %525 = vdwg.mxu0
        %526 = vst.msk [vmem:[%s207] sm:$0xff] %vm258, %v488
        %527 = vst.msk [vmem:[%s207 + $0x8] sm:$0xff] %vm258, %v493
        %528 = vst.msk [vmem:[%s207 + $0x10] sm:$0xff] %vm258, %v498
        %529 = vst.msk [vmem:[%s207 + $0x18] sm:$0xff] %vm258, %v503
        %530 = vst.msk [vmem:[%s207 + $0x20] sm:$0xff] %vm258, %v508
        %531 = vst.msk [vmem:[%s207 + $0x28] sm:$0xff] %vm258, %v513
        %532 = vst.msk [vmem:[%s207 + $0x30] sm:$0xff] %vm258, %v518
        %533 = vst.msk [vmem:[%s207 + $0x38] sm:$0xff] %vm258, %v523
        %s534 = sand.u32 %s112, 1
        %s535 = scalar_lea.sflag [#allocation4], %s534
        %s536 = sand.u32 %s112, 1
        %s537 = smul.addr %s536, 64
        %s538 = scalar_lea.vmem [#allocation5], %s537
        // Predicated region
        $region37: #{tpu_custom_call.1} parent=31 // pred_check
          %p539 = pneg %p122
        $region38: #{tpu_custom_call.1} parent=31 // pred_check_branch
          %541 = sbr.rel (%p539) target = $region40
        $region39: #{tpu_custom_call.1} parent=31 // pred_region
          %s542 = smul.u32 8, %s25
          %s544 = ssub.s32 1024, 1024
          %545 = vsyncadd %s535, %s544
          %s546 = smul.addr %s24, 8
          %s547 = sadd.s32 %s542, %s546
          %s548 = smul.addr %s547, 128
          %s549 = scalar_lea.hbm %s3, %s548
          %s550 = sshll.u32 %s538, 4
          %s551 = int_to_ptr.vmem [resolvable:$true] %s550
          %556 = dma.vmem_to_hbm [thread:$0]  %s551, 1024, %s549, %s535, 128, 128, 8
        $region40: #{tpu_custom_call.1} parent=31 // pred_fallthru
          _
      $region32: #{tpu_custom_call.1} parent=5 // pred_fallthru
        _
      %p557 = scmp.le.s32.totalorder 2, %s15
      // Predicated region
      $region41: #{tpu_custom_call.1} parent=5 // pred_check
        %p558 = pneg %p557
      $region42: #{tpu_custom_call.1} parent=5 // pred_check_branch
        %560 = sbr.rel (%p558) target = $region44
      $region43: #{tpu_custom_call.1} parent=5 // pred_region
        %s561 = ssub.s32 %s15, 2
        // Predicated region
        $region45: #{tpu_custom_call.1} parent=43 // pred_check
          %p562 = pneg %p128
        $region46: #{tpu_custom_call.1} parent=43 // pred_check_branch
          %564 = sbr.rel (%p562) target = $region48
        $region47: #{tpu_custom_call.1} parent=43 // pred_region
          %s565 = sand.u32 %s113, 1
          %s566 = scalar_lea.sflag [#allocation4], %s565
          %s567 = sand.u32 %s113, 1
          %s568 = smul.addr %s567, 64
          %s569 = scalar_lea.vmem [#allocation5], %s568
          %570 = dma.done %s566, 1024
        $region48: #{tpu_custom_call.1} parent=43 // pred_fallthru
          _
      $region44: #{tpu_custom_call.1} parent=5 // pred_fallthru
        _
    $region6: #{tpu_custom_call.1} parent=1 // loop_footer
      %s19 = sadd.s32 1, %s15
    $region7: #{tpu_custom_call.1} parent=1 // loop_footer_branch
      %14 = sbr.rel target = $region3
    $region8: #{tpu_custom_call.1} parent=1 // loop_exit
      _
    %571 = vsyncpa [#allocation3], 1
    %s572 = scalar_lea.sflag [#allocation3], 1
    %573 = vsyncpa %s572, 1
    %574 = vsyncpa [#allocation4], 1
    %s575 = scalar_lea.sflag [#allocation4], 1
    %576 = vsyncpa %s575, 1

</llo_original>
